<compile_context>
chip_gen: v5e
topology: v5e:2x2
jax: 0.10.0
libtpu: 0.0.40
codegen_flags: <defaults>
</compile_context>

<pallas_src>
import jax
import jax.numpy as jnp
from jax.experimental import pallas as pl
from jax.experimental.pallas import tpu as pltpu


def _round_up(x, m):
    return ((x + m - 1) // m) * m


def _make_mlp_kernel(num_layers, relu_flags):
    """Kernel: fused per-pixel MLP on a (C_in, tile_px) pixel tile."""

    def kernel(*refs):
        x_ref = refs[0]            # (1, C_in, T)
        o_ref = refs[-1]           # (1, C_out, T)
        wb = refs[1:-1]            # w0, b0, w1, b1, ...  w: (co, ci), b: (co, 1)

        h = x_ref[0]               # (C_in, T), native dtype -> MXU operand
        for li in range(num_layers):
            w = wb[2 * li][...]                       # (co, ci), native dtype
            b = wb[2 * li + 1][...]                   # (co, 1)
            acc = jnp.dot(w, h, preferred_element_type=jnp.float32)
            acc = acc + b.astype(jnp.float32)         # broadcast over lanes
            if relu_flags[li]:
                acc = jnp.maximum(acc, 0.0)
            if li + 1 < num_layers:
                # Feed the next matmul in the next weight's dtype (native MXU
                # input); the accumulation itself is f32.
                h = acc.astype(wb[2 * (li + 1)].dtype)
            else:
                h = acc
        o_ref[0] = h.astype(o_ref.dtype)

    return kernel


def _vmem_budgets():
    """Generation-aware VMEM numbers: (scoped vmem_limit_bytes, tile budget).

    ~48/40 MiB on v7x (64 MiB per-TC VMEM), ~96/80 MiB on 128-MiB v5e/v6e.
    Conservative (v7x) fallback if the hardware query is unavailable.
    """
    cap = 64 * 1024 * 1024
    try:
        cap = int(pltpu.get_tpu_info().vmem_capacity_bytes)
    except Exception:
        pass
    vmem_limit = min((cap * 3) // 4, 100 * 1024 * 1024)
    tile_budget = (vmem_limit * 5) // 6
    return vmem_limit, tile_budget


def _choose_tile_px(hw, n, c_in, c_out, c_max, elem_bytes, param_resident_bytes,
                    vmem_budget, target_step_bytes=2 << 20):
    """Pick the lane-axis pixel tile width.

    Sized so each grid step moves ~target_step_bytes of HBM traffic (amortizing
    the ~0.35us/step pipeline overhead even for tiny channel counts), capped so
    double-buffered I/O tiles + resident params + f32 fused intermediates fit
    the generation-specific VMEM budget, and never wider than the pixel axis.
    """
    # Bytes of HBM traffic per pixel per step (x in + y out).
    hbm_per_px = max((c_in + c_out) * elem_bytes, 1)
    tile = max(512, _round_up(target_step_bytes // hbm_per_px, 512))

    # VMEM per pixel: double-buffered x/out tiles + f32 fused intermediates
    # (acc + recast h + previous h can be live simultaneously -> 3*c_max*4).
    vmem_per_px = 2 * (c_in + c_out) * elem_bytes + 3 * c_max * 4
    avail = max(vmem_budget - param_resident_bytes, 1 << 20)
    cap = max(512, (avail // vmem_per_px) // 512 * 512)
    tile = min(tile, cap)

    # Never wider than the pixel axis; keep the block's lane dim a multiple of
    # 128 (or exactly HW when HW < 128, which equals the full array dim).
    if hw <= 128:
        return hw
    tile = min(tile, (hw // 128) * 128)
    tile = max(128, (tile // 128) * 128)

    # Keep >= 2 total grid steps when cheap so both v7x TensorCores get work.
    if n * pl.cdiv(hw, tile) < 2 and hw >= 1024:
        tile = max(128, _round_up(pl.cdiv(hw, 2), 128))
    return tile


def shared_mlp_pallas(x_nchw, weights, biases, relu_flags, *,
                      target_step_bytes=2 << 20):
    """SharedMLP forward pass.

    Args:
      x_nchw: (N, C_in, H, W) input.
      weights: list of (C_out_i, C_in_i) matrices (PyTorch 1x1 conv weights
        with the trailing 1x1 squeezed).
      biases:  list of (C_out_i,) vectors.
      relu_flags: per-layer bool, whether layer i is followed by ReLU.
      target_step_bytes: HBM bytes each grid step should move (tile sizing).
    Returns:
      (N, C_out_last, H, W) output, same dtype as the input.
    """
    N, C_in, H, W = x_nchw.shape
    num_layers = len(weights)
    assert num_layers > 0, "SharedMLP requires at least one layer"
    assert len(biases) == num_layers and len(relu_flags) == num_layers, (
        "weights / biases / relu_flags must have matching lengths")
    C_out = weights[-1].shape[0]
    HW = H * W
    elem_bytes = jnp.dtype(x_nchw.dtype).itemsize

    # bf16 input: run every layer's matmul as a native bf16 MXU pass (weights
    # cast once, here); bias add / ReLU / accumulation stay f32 in-kernel.
    if x_nchw.dtype == jnp.bfloat16:
        weights = [w.astype(jnp.bfloat16) for w in weights]

    param_bytes = sum(w.size * jnp.dtype(w.dtype).itemsize for w in weights)
    param_bytes += sum(b.size * jnp.dtype(b.dtype).itemsize for b in biases)
    c_max = max(w.shape[0] for w in weights)

    # Wide fused stacks: single-buffer the constant-index-map params so they
    # occupy 1x (not 2x) VMEM — matters on v7x's 64 MiB.  Tiny stacks keep the
    # default double-buffering (negligible cost).
    single_buffer_params = param_bytes > (2 << 20)
    param_spec_kwargs = (
        {"pipeline_mode": pl.Buffered(1)} if single_buffer_params else {})
    param_resident = param_bytes * (1 if single_buffer_params else 2)

    vmem_limit, tile_budget = _vmem_budgets()
    tile_px = _choose_tile_px(HW, N, C_in, C_out, c_max, elem_bytes,
                              param_resident, tile_budget,
                              target_step_bytes=target_step_bytes)

    # NCHW -> (N, C, H*W): a pure reshape, no HBM transpose or pad pass.  The
    # ragged last pixel tile (HW % tile_px != 0) is handled by Pallas masked
    # edge blocks: pixel columns are independent lanes, so garbage edge lanes
    # never mix with valid ones and their stores are clipped.
    x_rows = x_nchw.reshape(N, C_in, HW)

    kernel = _make_mlp_kernel(num_layers, relu_flags)

    # x / out are tiled over (batch, pixel-tile); params are whole, resident.
    in_specs = [pl.BlockSpec((1, C_in, tile_px), lambda n, t: (n, 0, t))]
    flat_params = []
    for w, b in zip(weights, biases):
        co, ci = w.shape
        in_specs.append(pl.BlockSpec((co, ci), lambda n, t: (0, 0),
                                     **param_spec_kwargs))
        in_specs.append(pl.BlockSpec((co, 1), lambda n, t: (0, 0),
                                     **param_spec_kwargs))
        flat_params.append(w)
        flat_params.append(b.reshape(co, 1))
    out_spec = pl.BlockSpec((1, C_out, tile_px), lambda n, t: (n, 0, t))

    total_px = N * HW
    flops = 2 * total_px * sum(int(w.shape[0]) * int(w.shape[1]) for w in weights)
    bytes_accessed = (x_rows.size * elem_bytes
                      + total_px * C_out * elem_bytes
                      + param_bytes)

    y_rows = pl.pallas_call(
        kernel,
        out_shape=jax.ShapeDtypeStruct((N, C_out, HW), x_nchw.dtype),
        grid_spec=pltpu.PrefetchScalarGridSpec(
            num_scalar_prefetch=0,
            grid=(N, pl.cdiv(HW, tile_px)),
            in_specs=in_specs,
            out_specs=out_spec,
        ),
        compiler_params=pltpu.CompilerParams(
            dimension_semantics=("parallel", "parallel"),
            vmem_limit_bytes=vmem_limit,
        ),
        cost_estimate=pl.CostEstimate(
            flops=flops, transcendentals=0, bytes_accessed=bytes_accessed),
    )(x_rows, *flat_params)

    return y_rows.reshape(N, C_out, H, W)


def init_shared_mlp_params(key, input_size, output_size, hidden_size,
                           num_hiddens):
    """Deterministic synthetic parameters matching SharedMLP.__init__ shapes.

    Weights use the PyTorch conv layout (C_out, C_in) (1x1 kernel squeezed).
    """
    weights, biases, relu_flags = [], [], []
    c_in = input_size
    for _ in range(num_hiddens):
        key, kw, kb = jax.random.split(key, 3)
        weights.append(jax.random.normal(kw, (hidden_size, c_in), jnp.float32) * 0.1)
        biases.append(jax.random.normal(kb, (hidden_size,), jnp.float32) * 0.1)
        relu_flags.append(True)          # hidden layers use ReLU
        c_in = hidden_size
    if output_size is not None:
        key, kw, kb = jax.random.split(key, 3)
        weights.append(jax.random.normal(kw, (output_size, c_in), jnp.float32) * 0.1)
        biases.append(jax.random.normal(kb, (output_size,), jnp.float32) * 0.1)
        relu_flags.append(False)         # output layer: Identity activation
    return weights, biases, relu_flags


def shared_mlp_ref(x_nchw, weights, biases, relu_flags):
    """Plain-JAX reference (same semantics as the PyTorch module)."""
    N, C, H, W = x_nchw.shape
    h = x_nchw.reshape(N, C, H * W).astype(jnp.float32)
    for w, b, relu in zip(weights, biases, relu_flags):
        h = jnp.einsum("oc,ncp->nop", w.astype(jnp.float32), h)
        h = h + b.astype(jnp.float32)[None, :, None]
        if relu:
            h = jnp.maximum(h, 0.0)
    co = weights[-1].shape[0]
    return h.reshape(N, co, H, W).astype(x_nchw.dtype)


if __name__ == "__main__":
    # Small config consistent with SharedMLP(input_size=4, output_size=8,
    # hidden_size=32, num_hiddens=1)
    N, C_IN, HGT, WID = 2, 4, 16, 16
    HIDDEN, OUT, NUM_HIDDENS = 32, 8, 1

    key = jax.random.PRNGKey(0)
    key, kx = jax.random.split(key)
    x = jax.random.normal(kx, (N, C_IN, HGT, WID), jnp.float32)

    weights, biases, relu_flags = init_shared_mlp_params(
        key, C_IN, OUT, HIDDEN, NUM_HIDDENS)

    y = shared_mlp_pallas(x, weights, biases, relu_flags)
    y = jax.block_until_ready(y)
    y_ref = shared_mlp_ref(x, weights, biases, relu_flags)
    assert y.shape == (N, OUT, HGT, WID), y.shape
    assert jnp.allclose(y, y_ref, atol=1e-4, rtol=1e-4), "mismatch vs reference"

    # Ragged pixel axis (H*W not a multiple of the lane tile) exercises the
    # masked edge-block path that replaced the wrapper-side pad/slice.
    key, kx2 = jax.random.split(key)
    x2 = jax.random.normal(kx2, (1, C_IN, 18, 18), jnp.float32)
    y2 = jax.block_until_ready(shared_mlp_pallas(x2, weights, biases, relu_flags))
    y2_ref = shared_mlp_ref(x2, weights, biases, relu_flags)
    assert y2.shape == (1, OUT, 18, 18), y2.shape
    assert jnp.allclose(y2, y2_ref, atol=1e-4, rtol=1e-4), "ragged-tile mismatch"

    print("KERNEL_OK")
</pallas_src>

<mosaic_0001>
module attributes {stable_mosaic.version = 11 : i64} {
  func.func @kernel(%arg0: i32, %arg1: i32, %arg2: memref<1x4x256xf32, #tpu.memory_space<vmem>>, %arg3: memref<32x4xf32, #tpu.memory_space<vmem>>, %arg4: memref<32x1xf32, #tpu.memory_space<vmem>>, %arg5: memref<8x32xf32, #tpu.memory_space<vmem>>, %arg6: memref<8x1xf32, #tpu.memory_space<vmem>>, %arg7: memref<1x8x256xf32, #tpu.memory_space<vmem>>) attributes {dimension_semantics = [#tpu.dimension_semantics<parallel>, #tpu.dimension_semantics<parallel>], iteration_bounds = array<i64: 2, 1>, scalar_prefetch = 0 : i64, scratch_operands = 0 : i64, tpu.core_type = #tpu.core_type<tc>, window_params = [{transform_indices = @transform_0, window_bounds = array<i64: 1, 4, 256>}, {pipeline_mode = #tpu.pipeline_mode<synchronous>, transform_indices = @transform_1, window_bounds = array<i64: 32, 4>}, {pipeline_mode = #tpu.pipeline_mode<synchronous>, transform_indices = @transform_2, window_bounds = array<i64: 32, 1>}, {pipeline_mode = #tpu.pipeline_mode<synchronous>, transform_indices = @transform_3, window_bounds = array<i64: 8, 32>}, {pipeline_mode = #tpu.pipeline_mode<synchronous>, transform_indices = @transform_4, window_bounds = array<i64: 8, 1>}, {transform_indices = @transform_5, window_bounds = array<i64: 1, 8, 256>}]} {
    %c0 = arith.constant 0 : index
    %c0_0 = arith.constant 0 : index
    %c0_1 = arith.constant 0 : index
    %0 = vector.load %arg2[%c0, %c0_0, %c0_1] : memref<1x4x256xf32, #tpu.memory_space<vmem>>, vector<1x4x256xf32>
    %1 = vector.shape_cast %0 : vector<1x4x256xf32> to vector<4x256xf32>
    %c0_2 = arith.constant 0 : index
    %c0_3 = arith.constant 0 : index
    %2 = vector.load %arg3[%c0_2, %c0_3] : memref<32x4xf32, #tpu.memory_space<vmem>>, vector<32x4xf32>
    %c0_4 = arith.constant 0 : index
    %c0_5 = arith.constant 0 : index
    %3 = vector.load %arg4[%c0_4, %c0_5] : memref<32x1xf32, #tpu.memory_space<vmem>>, vector<32x1xf32>
    %cst = arith.constant dense<0.000000e+00> : vector<32x256xf32>
    %4 = tpu.matmul %2, %1, %cst {dimension_numbers = #tpu.dot_dimension_numbers<[1], [0], [0], [1], [0, 0, 1, 1], [], []>} : vector<32x4xf32>, vector<4x256xf32>, vector<32x256xf32> -> vector<32x256xf32>
    %5 = vector.broadcast %3 : vector<32x1xf32> to vector<32x256xf32>
    %6 = arith.addf %4, %5 : vector<32x256xf32>
    %cst_6 = arith.constant 0.000000e+00 : f32
    %7 = vector.broadcast %cst_6 : f32 to vector<32x256xf32>
    %8 = arith.maximumf %6, %7 : vector<32x256xf32>
    %c0_7 = arith.constant 0 : index
    %c0_8 = arith.constant 0 : index
    %9 = vector.load %arg5[%c0_7, %c0_8] : memref<8x32xf32, #tpu.memory_space<vmem>>, vector<8x32xf32>
    %c0_9 = arith.constant 0 : index
    %c0_10 = arith.constant 0 : index
    %10 = vector.load %arg6[%c0_9, %c0_10] : memref<8x1xf32, #tpu.memory_space<vmem>>, vector<8x1xf32>
    %cst_11 = arith.constant dense<0.000000e+00> : vector<8x256xf32>
    %11 = tpu.matmul %9, %8, %cst_11 {dimension_numbers = #tpu.dot_dimension_numbers<[1], [0], [0], [1], [0, 0, 1, 1], [], []>} : vector<8x32xf32>, vector<32x256xf32>, vector<8x256xf32> -> vector<8x256xf32>
    %12 = vector.broadcast %10 : vector<8x1xf32> to vector<8x256xf32>
    %13 = arith.addf %11, %12 : vector<8x256xf32>
    %c0_12 = arith.constant 0 : index
    %c0_13 = arith.constant 0 : index
    %c0_14 = arith.constant 0 : index
    %14 = vector.load %arg7[%c0_12, %c0_13, %c0_14] : memref<1x8x256xf32, #tpu.memory_space<vmem>>, vector<1x8x256xf32>
    %15 = vector.shape_cast %14 : vector<1x8x256xf32> to vector<8x256xf32>
    %16 = vector.shape_cast %13 : vector<8x256xf32> to vector<1x8x256xf32>
    tpu.vector_store %arg7[%c0_12, %c0_13, %c0_14], %16 {strides = array<i32>} : memref<1x8x256xf32, #tpu.memory_space<vmem>>, vector<1x8x256xf32>,
    return
  }
  func.func @transform_0(%arg0: i32, %arg1: i32) -> (i32, i32, i32) {
    %c0_i32 = arith.constant 0 : i32
    %c0_i32_0 = arith.constant 0 : i32
    return %arg0, %c0_i32, %arg1 : i32, i32, i32
  }
  func.func @transform_1(%arg0: i32, %arg1: i32) -> (i32, i32) {
    %c0_i32 = arith.constant 0 : i32
    %c0_i32_0 = arith.constant 0 : i32
    %c0_i32_1 = arith.constant 0 : i32
    return %c0_i32, %c0_i32_0 : i32, i32
  }
  func.func @transform_2(%arg0: i32, %arg1: i32) -> (i32, i32) {
    %c0_i32 = arith.constant 0 : i32
    %c0_i32_0 = arith.constant 0 : i32
    %c0_i32_1 = arith.constant 0 : i32
    return %c0_i32, %c0_i32_0 : i32, i32
  }
  func.func @transform_3(%arg0: i32, %arg1: i32) -> (i32, i32) {
    %c0_i32 = arith.constant 0 : i32
    %c0_i32_0 = arith.constant 0 : i32
    %c0_i32_1 = arith.constant 0 : i32
    return %c0_i32, %c0_i32_0 : i32, i32
  }
  func.func @transform_4(%arg0: i32, %arg1: i32) -> (i32, i32) {
    %c0_i32 = arith.constant 0 : i32
    %c0_i32_0 = arith.constant 0 : i32
    %c0_i32_1 = arith.constant 0 : i32
    return %c0_i32, %c0_i32_0 : i32, i32
  }
  func.func @transform_5(%arg0: i32, %arg1: i32) -> (i32, i32, i32) {
    %c0_i32 = arith.constant 0 : i32
    %c0_i32_0 = arith.constant 0 : i32
    return %arg0, %c0_i32, %arg1 : i32, i32, i32
  }
}

</mosaic_0001>

<llo_original>
// kernel: tpu_custom_call.1
$region0: #{tpu_custom_call.1}
  #allocation0 [shape = 'u32[]', space=smem, size = 0x4, offset = 0x4, fixed_abs, tag = 'smem constant byte address 0x4 - core index']
  #allocation1 [shape = 'u32[72,128]{1,0:T(1,128)}', space=vmem, size = 0x9000, scoped, tag = 'internal scratch']
  %s0 = inlined_call_operand.vmem [shape: f32[2,4,256], index: 0, kind: input, shape index: {}]
  %s1 = inlined_call_operand.vmem [shape: f32[32,4], index: 1, kind: input, shape index: {}]
  %s2 = inlined_call_operand.vmem [shape: f32[32,1], index: 2, kind: input, shape index: {}]
  %s3 = inlined_call_operand.vmem [shape: f32[8,32], index: 3, kind: input, shape index: {}]
  %s4 = inlined_call_operand.vmem [shape: f32[8,1], index: 4, kind: input, shape index: {}]
  %s5 = inlined_call_operand.hbm [shape: f32[2,8,256], index: 5, kind: output, shape index: {}]
  %s6 = sld [smem:[#allocation0]]
  $region53: #{tpu_custom_call.1} parent=0
    _
  %s8 = ssub.s32 1, %s6
  %s9 = scalar_select 0, %s8, %s6
  $region1: #{tpu_custom_call.1} parent=0
    #allocation2 [shape = 'u8[16384]{0}', space=vmem, size = 0x4000, scoped, tag = 'output window, operand 0']
    #allocation3 [shape = 's32[2]{0}', space=sflag, size = 0x8, scoped, tag = 'scoped memory for tpu_custom_call.1']
    %10 = vsyncpa [#allocation3], 0
    %s11 = scalar_lea.sflag [#allocation3], 1
    %12 = vsyncpa %s11, 0
    loop: start=0, step=1, limit=4
    $region2: #{tpu_custom_call.1} parent=1 // loop_pre_header
      _
    $region3: #{tpu_custom_call.1} parent=1 // loop_header
      %s14 = sphi 0, %s18
      %p15 = scmp.ge.s32.totalorder %s14, 4
      %s21 = sphi 0, %s33
      %s22 = sphi 0, %s29
      %s23 = sphi 0, %s21
      %s24 = sphi 0, %s22
      %s25 = sphi 0, %s23
      %s26 = sphi 0, %s24
      %s38 = sphi 0, %s40
      %s41 = sphi 0, %s38
      %s42 = sphi 0, %s41
      %s58 = sphi 0, %s42
      %s62 = sphi 0, %s62
      %s64 = sphi 0, %s62
      %s65 = sphi 0, %s64
      %s79 = sphi 0, %s65
      %s83 = sphi 0, %s83
      %s85 = sphi 0, %s83
      %s86 = sphi 0, %s85
      %s100 = sphi 0, %s86
      %s104 = sphi 0, %s104
      %s106 = sphi 0, %s104
      %s107 = sphi 0, %s106
      %s121 = sphi 0, %s107
      %s125 = sphi 0, %s125
      %s127 = sphi 0, %s125
      %s128 = sphi 0, %s127
      %s142 = sphi 0, %s128
      %s150 = sphi 0, %s152
      %s153 = sphi 0, %s150
      %s154 = sphi 0, %s153
      %s170 = sphi 0, %s154
    $region4: #{tpu_custom_call.1} parent=1 // loop_header_branch
      %17 = sbr.rel (%p15) target = $region8
    $region5: #{tpu_custom_call.1} parent=1 // loop_body
      %s19 = ssub.s32 %s14, 1
      %s20 = ssub.s32 %s14, 2
      %s27 = sadd.s32 1, %s22
      %p28 = scmp.ge.s32.totalorder %s27, 1
      %s29 = scalar_select %p28, 0, %s27
      %s30 = sadd.s32 1, %s21
      %s31 = scalar_select %p28, %s30, %s21
      %p32 = scmp.ge.s32.totalorder %s31, 2
      %s33 = scalar_select %p32, 0, %s31
      %s34 = ssub.s32 %s21, %s33
      %s35 = ssub.s32 %s22, %s29
      %s36 = sor.u32 %s34, %s35
      %p37 = scmp.eq.s32.totalorder %s36, 0
      %s39 = sadd.s32 %s38, 1
      %s40 = scalar_select %p37, %s38, %s39
      %p43 = pneg %p37
      %p44 = scmp.eq.s32.totalorder %s14, 1
      %p45 = por %p43, %p44
      %p46 = scmp.ne.s32.totalorder %s38, %s41
      %p47 = scmp.eq.s32.totalorder %s14, 0
      %p48 = por %p46, %p47
      %p49 = scmp.ne.s32.totalorder %s38, %s41
      %p50 = scmp.eq.s32.totalorder %s19, 1
      %p51 = por %p49, %p50
      %p52 = scmp.ne.s32.totalorder %s41, %s42
      %p53 = scmp.eq.s32.totalorder %s19, 0
      %p54 = por %p52, %p53
      %p55 = scmp.ne.s32.totalorder %s41, %s42
      %p56 = scmp.eq.s32.totalorder %s20, 1
      %p57 = por %p55, %p56
      %p59 = scmp.ne.s32.totalorder %s42, %s58
      %p60 = scmp.eq.s32.totalorder %s20, 0
      %p61 = por %p59, %p60
      %s63 = sadd.s32 %s62, 1
      %p66 = scmp.eq.s32.totalorder %s14, 1
      %p67 = scmp.ne.s32.totalorder %s62, %s64
      %p68 = scmp.eq.s32.totalorder %s14, 0
      %p69 = por %p67, %p68
      %p70 = scmp.ne.s32.totalorder %s62, %s64
      %p71 = scmp.eq.s32.totalorder %s19, 1
      %p72 = por %p70, %p71
      %p73 = scmp.ne.s32.totalorder %s64, %s65
      %p74 = scmp.eq.s32.totalorder %s19, 0
      %p75 = por %p73, %p74
      %p76 = scmp.ne.s32.totalorder %s64, %s65
      %p77 = scmp.eq.s32.totalorder %s20, 1
      %p78 = por %p76, %p77
      %p80 = scmp.ne.s32.totalorder %s65, %s79
      %p81 = scmp.eq.s32.totalorder %s20, 0
      %p82 = por %p80, %p81
      %s84 = sadd.s32 %s83, 1
      %p87 = scmp.eq.s32.totalorder %s14, 1
      %p88 = scmp.ne.s32.totalorder %s83, %s85
      %p89 = scmp.eq.s32.totalorder %s14, 0
      %p90 = por %p88, %p89
      %p91 = scmp.ne.s32.totalorder %s83, %s85
      %p92 = scmp.eq.s32.totalorder %s19, 1
      %p93 = por %p91, %p92
      %p94 = scmp.ne.s32.totalorder %s85, %s86
      %p95 = scmp.eq.s32.totalorder %s19, 0
      %p96 = por %p94, %p95
      %p97 = scmp.ne.s32.totalorder %s85, %s86
      %p98 = scmp.eq.s32.totalorder %s20, 1
      %p99 = por %p97, %p98
      %p101 = scmp.ne.s32.totalorder %s86, %s100
      %p102 = scmp.eq.s32.totalorder %s20, 0
      %p103 = por %p101, %p102
      %s105 = sadd.s32 %s104, 1
      %p108 = scmp.eq.s32.totalorder %s14, 1
      %p109 = scmp.ne.s32.totalorder %s104, %s106
      %p110 = scmp.eq.s32.totalorder %s14, 0
      %p111 = por %p109, %p110
      %p112 = scmp.ne.s32.totalorder %s104, %s106
      %p113 = scmp.eq.s32.totalorder %s19, 1
      %p114 = por %p112, %p113
      %p115 = scmp.ne.s32.totalorder %s106, %s107
      %p116 = scmp.eq.s32.totalorder %s19, 0
      %p117 = por %p115, %p116
      %p118 = scmp.ne.s32.totalorder %s106, %s107
      %p119 = scmp.eq.s32.totalorder %s20, 1
      %p120 = por %p118, %p119
      %p122 = scmp.ne.s32.totalorder %s107, %s121
      %p123 = scmp.eq.s32.totalorder %s20, 0
      %p124 = por %p122, %p123
      %s126 = sadd.s32 %s125, 1
      %p129 = scmp.eq.s32.totalorder %s14, 1
      %p130 = scmp.ne.s32.totalorder %s125, %s127
      %p131 = scmp.eq.s32.totalorder %s14, 0
      %p132 = por %p130, %p131
      %p133 = scmp.ne.s32.totalorder %s125, %s127
      %p134 = scmp.eq.s32.totalorder %s19, 1
      %p135 = por %p133, %p134
      %p136 = scmp.ne.s32.totalorder %s127, %s128
      %p137 = scmp.eq.s32.totalorder %s19, 0
      %p138 = por %p136, %p137
      %p139 = scmp.ne.s32.totalorder %s127, %s128
      %p140 = scmp.eq.s32.totalorder %s20, 1
      %p141 = por %p139, %p140
      %p143 = scmp.ne.s32.totalorder %s128, %s142
      %p144 = scmp.eq.s32.totalorder %s20, 0
      %p145 = por %p143, %p144
      %s146 = ssub.s32 %s21, %s33
      %s147 = ssub.s32 %s22, %s29
      %s148 = sor.u32 %s146, %s147
      %p149 = scmp.eq.s32.totalorder %s148, 0
      %s151 = sadd.s32 %s150, 1
      %s152 = scalar_select %p149, %s150, %s151
      %p155 = pneg %p149
      %p156 = scmp.eq.s32.totalorder %s14, 1
      %p157 = por %p155, %p156
      %p158 = scmp.ne.s32.totalorder %s150, %s153
      %p159 = scmp.eq.s32.totalorder %s14, 0
      %p160 = por %p158, %p159
      %p161 = scmp.ne.s32.totalorder %s150, %s153
      %p162 = scmp.eq.s32.totalorder %s19, 1
      %p163 = por %p161, %p162
      %p164 = scmp.ne.s32.totalorder %s153, %s154
      %p165 = scmp.eq.s32.totalorder %s19, 0
      %p166 = por %p164, %p165
      %p167 = scmp.ne.s32.totalorder %s153, %s154
      %p168 = scmp.eq.s32.totalorder %s20, 1
      %p169 = por %p167, %p168
      %p171 = scmp.ne.s32.totalorder %s154, %s170
      %p172 = scmp.eq.s32.totalorder %s20, 0
      %p173 = por %p171, %p172
      %p174 = scmp.le.s32.totalorder 1, %s14
      %p175 = scmp.lt.s32.totalorder %s14, 3
      %p176 = pnand %p174, %p175
      %p177 = pneg %p176
      // Predicated region
      $region9: #{tpu_custom_call.1} parent=5 // pred_check
        _
      $region10: #{tpu_custom_call.1} parent=5 // pred_check_branch
        %179 = sbr.rel (%p176) target = $region12
      $region11: #{tpu_custom_call.1} parent=5 // pred_region
        %s180 = ssub.s32 %s14, 1
        // Predicated region
        $region13: #{tpu_custom_call.1} parent=11 // pred_check
          %p181 = pneg %p75
        $region14: #{tpu_custom_call.1} parent=11 // pred_check_branch
          %183 = sbr.rel (%p181) target = $region16
        $region15: #{tpu_custom_call.1} parent=11 // pred_region
          _
        $region16: #{tpu_custom_call.1} parent=11 // pred_fallthru
          _
        // Predicated region
        $region17: #{tpu_custom_call.1} parent=11 // pred_check
          %p184 = pneg %p96
        $region18: #{tpu_custom_call.1} parent=11 // pred_check_branch
          %186 = sbr.rel (%p184) target = $region20
        $region19: #{tpu_custom_call.1} parent=11 // pred_region
          _
        $region20: #{tpu_custom_call.1} parent=11 // pred_fallthru
          _
        // Predicated region
        $region21: #{tpu_custom_call.1} parent=11 // pred_check
          %p187 = pneg %p117
        $region22: #{tpu_custom_call.1} parent=11 // pred_check_branch
          %189 = sbr.rel (%p187) target = $region24
        $region23: #{tpu_custom_call.1} parent=11 // pred_region
          _
        $region24: #{tpu_custom_call.1} parent=11 // pred_fallthru
          _
        // Predicated region
        $region25: #{tpu_custom_call.1} parent=11 // pred_check
          %p190 = pneg %p138
        $region26: #{tpu_custom_call.1} parent=11 // pred_check_branch
          %192 = sbr.rel (%p190) target = $region28
        $region27: #{tpu_custom_call.1} parent=11 // pred_region
          _
        $region28: #{tpu_custom_call.1} parent=11 // pred_fallthru
          _
      $region12: #{tpu_custom_call.1} parent=5 // pred_fallthru
        _
      %p193 = scmp.lt.s32.totalorder %s14, 2
      // Predicated region
      $region29: #{tpu_custom_call.1} parent=5 // pred_check
        %p194 = pneg %p193
      $region30: #{tpu_custom_call.1} parent=5 // pred_check_branch
        %196 = sbr.rel (%p194) target = $region32
      $region31: #{tpu_custom_call.1} parent=5 // pred_region
        // Predicated region
        $region33: #{tpu_custom_call.1} parent=31 // pred_check
          %p197 = pneg %p48
        $region34: #{tpu_custom_call.1} parent=31 // pred_check_branch
          %199 = sbr.rel (%p197) target = $region36
        $region35: #{tpu_custom_call.1} parent=31 // pred_region
          %s200 = smul.u32 2, %s22
          %p201 = scmp.lt.s32.totalorder %s21, 1
          %s202 = scalar_select %p201, %s21, 1
          %p203 = scmp.lt.s32.totalorder %s200, 1
          %s204 = scalar_select %p203, %s200, 1
          %s205 = smul.addr %s202, 2
          %s206 = sadd.s32 %s204, %s205
          %s207 = smul.addr %s206, 4
          %s208 = scalar_lea.vmem %s0, %s207
          %s209 = smul.u32 2, %s22
        $region36: #{tpu_custom_call.1} parent=31 // pred_fallthru
          _
      $region32: #{tpu_custom_call.1} parent=5 // pred_fallthru
        _
      %p210 = scmp.le.s32.totalorder 1, %s14
      %p211 = scmp.lt.s32.totalorder %s14, 3
      %p212 = pnand %p210, %p211
      %p213 = pneg %p212
      // Predicated region
      $region37: #{tpu_custom_call.1} parent=5 // pred_check
        _
      $region38: #{tpu_custom_call.1} parent=5 // pred_check_branch
        %215 = sbr.rel (%p212) target = $region40
      $region39: #{tpu_custom_call.1} parent=5 // pred_region
        %s216 = ssub.s32 %s14, 1
        %s217 = smul.u32 2, %s24
        %p218 = scmp.lt.s32.totalorder %s23, 1
        %s219 = scalar_select %p218, %s23, 1
        %p220 = scmp.lt.s32.totalorder %s217, 1
        %s221 = scalar_select %p220, %s217, 1
        %s222 = smul.addr %s219, 2
        %s223 = sadd.s32 %s221, %s222
        %s224 = smul.addr %s223, 4
        %s225 = scalar_lea.vmem %s0, %s224
        %p226 = pneg %p54
        %p227 = pneg %p51
        %p228 = pneg %p75
        %p229 = pneg %p72
        %p230 = pneg %p96
        %p231 = pneg %p93
        %p232 = pneg %p117
        %p233 = pneg %p114
        %p234 = pneg %p138
        %p235 = pneg %p135
        %p236 = pneg %p166
        %p237 = pneg %p163
        %s238 = sand.u32 %s153, 1
        %s239 = scalar_lea.sflag [#allocation3], %s238
        %s240 = sand.u32 %s153, 1
        %s241 = smul.addr %s240, 16
        %s242 = scalar_lea.vmem [#allocation2], %s241
        %s243 = smul.u32 2, %s24
        %p244 = scmp.lt.s32.totalorder %s23, 1
        %s245 = scalar_select %p244, %s23, 1
        %p246 = scmp.lt.s32.totalorder %s243, 1
        %s247 = scalar_select %p246, %s243, 1
        %s248 = smul.addr %s245, 2
        %s249 = sadd.s32 %s247, %s248
        %s250 = smul.addr %s249, 4
        %s251 = scalar_lea.vmem %s0, %s250
        %s252 = smul.u32 2, %s24
        %s253 = smul.u32 2, %s24
        %v254 = vld [vmem:[%s251] sm:$0xff]
        %v255 = vld [vmem:[%s1] sm:$0xff]
        %v256 = vld [vmem:[%s1 + $0x8] sm:$0xff]
        %v257 = vld [vmem:[%s1 + $0x10] sm:$0xff]
        %v258 = vld [vmem:[%s1 + $0x18] sm:$0xff]
        %v259 = vld [vmem:[%s2] sm:$0xff]
        %v260 = vld [vmem:[%s2 + $0x8] sm:$0xff]
        %v261 = vld [vmem:[%s2 + $0x10] sm:$0xff]
        %v262 = vld [vmem:[%s2 + $0x18] sm:$0xff]
        %264 = vset.pattern.permute.xlu0 0
        %265 = vperm.xlu0 %264, %v259
        %v266 = vpop.permute.xlu0 %265
        %269 = vset.pattern.permute.xlu0 0
        %270 = vperm.xlu0 %269, %v260
        %v271 = vpop.permute.xlu0 %270
        %274 = vset.pattern.permute.xlu0 0
        %275 = vperm.xlu0 %274, %v261
        %v276 = vpop.permute.xlu0 %275
        %279 = vset.pattern.permute.xlu0 0
        %280 = vperm.xlu0 %279, %v262
        %v281 = vpop.permute.xlu0 %280
        %284 = vst [vmem:[#allocation1] ss:$2 sm:$0xff] %v254
        %v285 = vld.sshfl [vmem:[#allocation1] sm:$0xff pattern:$0x75316420]
        %v286 = vld.sshfl [vmem:[#allocation1 + $0x8] sm:$0xff pattern:$0x75316420]
        %vm287 = vcmask 31744
        %v289 = vsel %vm287, %v255, 0
        %v292 = vsel %vm287, %v256, 0
        %v295 = vsel %vm287, %v257, 0
        %v298 = vsel %vm287, %v258, 0
        %vm300 = vcmask 1043456
        %v301 = vsel %vm300, %v285, 0
        %v303 = vsel %vm300, %v286, 0
        %305 = vmatpush.msra.mxu0 0.0
        %306 = vmatpush.msra.mxu0 0.0
        %307 = vmatpush.msra.mxu0 0.0
        %308 = vmatpush.msra.mxu0 0.0
        %309 = vmatpush.msra.mxu0 0.0
        %310 = vmatpush.msra.mxu0 0.0
        %311 = vmatpush.msra.mxu0 0.0
        %312 = vmatpush.msra.mxu0 0.0
        %313 = vmatpush.msra.mxu0 0.0
        %314 = vmatpush.msra.mxu0 0.0
        %315 = vmatpush.msra.mxu0 0.0
        %316 = vmatpush.msra.mxu0 0.0
        %317 = vmatpush.msra.mxu0 0.0
        %318 = vmatpush.msra.mxu0 0.0
        %319 = vmatpush.msra.mxu0 0.0
        %320 = vmatpush.msra.mxu0 %v301
        %321 = vmatmul.f32.gmra.mxu0 %v289
        %v322 = vpop.f32.mrf.mxu0
        %v323 = vadd.f32 %v266, %v322
        %324 = vmatmul.f32.gmra.mxu0 %v292
        %v325 = vpop.f32.mrf.mxu0
        %v326 = vadd.f32 %v271, %v325
        %327 = vmatmul.f32.gmra.mxu0 %v295
        %v328 = vpop.f32.mrf.mxu0
        %v329 = vadd.f32 %v276, %v328
        %330 = vmatmul.f32.gmra.mxu0 %v298
        %v331 = vpop.f32.mrf.mxu0
        %v332 = vadd.f32 %v281, %v331
        %333 = vdwg.mxu0
        %334 = vmatpush.msra.mxu0 0.0
        %335 = vmatpush.msra.mxu0 0.0
        %336 = vmatpush.msra.mxu0 0.0
        %337 = vmatpush.msra.mxu0 0.0
        %338 = vmatpush.msra.mxu0 0.0
        %339 = vmatpush.msra.mxu0 0.0
        %340 = vmatpush.msra.mxu0 0.0
        %341 = vmatpush.msra.mxu0 0.0
        %342 = vmatpush.msra.mxu0 0.0
        %343 = vmatpush.msra.mxu0 0.0
        %344 = vmatpush.msra.mxu0 0.0
        %345 = vmatpush.msra.mxu0 0.0
        %346 = vmatpush.msra.mxu0 0.0
        %347 = vmatpush.msra.mxu0 0.0
        %348 = vmatpush.msra.mxu0 0.0
        %349 = vmatpush.msra.mxu0 %v303
        %350 = vmatmul.f32.gmra.mxu0 %v289
        %v351 = vpop.f32.mrf.mxu0
        %v352 = vadd.f32 %v266, %v351
        %353 = vmatmul.f32.gmra.mxu0 %v292
        %v354 = vpop.f32.mrf.mxu0
        %v355 = vadd.f32 %v271, %v354
        %356 = vmatmul.f32.gmra.mxu0 %v295
        %v357 = vpop.f32.mrf.mxu0
        %v358 = vadd.f32 %v276, %v357
        %359 = vmatmul.f32.gmra.mxu0 %v298
        %v360 = vpop.f32.mrf.mxu0
        %v361 = vadd.f32 %v281, %v360
        %362 = vdwg.mxu0
        %v363 = vmax.f32 %v323, 0.0
        %v364 = vmax.f32 %v352, 0.0
        %v365 = vmax.f32 %v326, 0.0
        %v366 = vmax.f32 %v355, 0.0
        %v367 = vmax.f32 %v329, 0.0
        %v368 = vmax.f32 %v358, 0.0
        %v369 = vmax.f32 %v332, 0.0
        %v370 = vmax.f32 %v361, 0.0
        %v371 = vld [vmem:[%s3] sm:$0xff]
        %v372 = vld [vmem:[%s4] sm:$0xff]
        %374 = vset.pattern.permute.xlu0 0
        %375 = vperm.xlu0 %374, %v372
        %v376 = vpop.permute.xlu0 %375
        %vm378 = vcmask 261120
        %v380 = vsel %vm378, %v371, 0
        %382 = vmatpush.msra.mxu0 0.0
        %383 = vmatpush.msra.mxu0 0.0
        %384 = vmatpush.msra.mxu0 0.0
        %385 = vmatpush.msra.mxu0 0.0
        %386 = vmatpush.msra.mxu0 0.0
        %387 = vmatpush.msra.mxu0 0.0
        %388 = vmatpush.msra.mxu0 0.0
        %389 = vmatpush.msra.mxu0 0.0
        %390 = vmatpush.msra.mxu0 0.0
        %391 = vmatpush.msra.mxu0 0.0
        %392 = vmatpush.msra.mxu0 0.0
        %393 = vmatpush.msra.mxu0 0.0
        %394 = vmatpush.msra.mxu0 %v369
        %395 = vmatpush.msra.mxu0 %v367
        %396 = vmatpush.msra.mxu0 %v365
        %397 = vmatpush.msra.mxu0 %v363
        %398 = vmatmul.f32.gmra.mxu0 %v380
        %v399 = vpop.f32.mrf.mxu0
        %v400 = vadd.f32 %v376, %v399
        %401 = vdwg.mxu0
        %402 = vmatpush.msra.mxu0 0.0
        %403 = vmatpush.msra.mxu0 0.0
        %404 = vmatpush.msra.mxu0 0.0
        %405 = vmatpush.msra.mxu0 0.0
        %406 = vmatpush.msra.mxu0 0.0
        %407 = vmatpush.msra.mxu0 0.0
        %408 = vmatpush.msra.mxu0 0.0
        %409 = vmatpush.msra.mxu0 0.0
        %410 = vmatpush.msra.mxu0 0.0
        %411 = vmatpush.msra.mxu0 0.0
        %412 = vmatpush.msra.mxu0 0.0
        %413 = vmatpush.msra.mxu0 0.0
        %414 = vmatpush.msra.mxu0 %v370
        %415 = vmatpush.msra.mxu0 %v368
        %416 = vmatpush.msra.mxu0 %v366
        %417 = vmatpush.msra.mxu0 %v364
        %418 = vmatmul.f32.gmra.mxu0 %v380
        %v419 = vpop.f32.mrf.mxu0
        %v420 = vadd.f32 %v376, %v419
        %421 = vdwg.mxu0
        %422 = vst [vmem:[%s242] sm:$0xff] %v400
        %423 = vst [vmem:[%s242 + $0x8] sm:$0xff] %v420
        %s424 = sand.u32 %s153, 1
        %s425 = scalar_lea.sflag [#allocation3], %s424
        %s426 = sand.u32 %s153, 1
        %s427 = smul.addr %s426, 16
        %s428 = scalar_lea.vmem [#allocation2], %s427
        // Predicated region
        $region41: #{tpu_custom_call.1} parent=39 // pred_check
          %p429 = pneg %p163
        $region42: #{tpu_custom_call.1} parent=39 // pred_check_branch
          %431 = sbr.rel (%p429) target = $region44
        $region43: #{tpu_custom_call.1} parent=39 // pred_region
          %s432 = smul.u32 2, %s24
          %434 = vsyncadd %s425, 0
          %s435 = smul.addr %s23, 2
          %s436 = sadd.s32 %s432, %s435
          %s437 = smul.addr %s436, 8
          %s438 = scalar_lea.hbm %s5, %s437
          %s440 = sshll.u32 %s428, 4
          %s441 = int_to_ptr.vmem [resolvable:$true] %s440
          %s442 = sshll.u32 %s438, 4
          %s443 = int_to_ptr.hbm [resolvable:$true] %s442
          %445 = dma.vmem_to_hbm [thread:$0]  %s441, 256, %s443, %s425
        $region44: #{tpu_custom_call.1} parent=39 // pred_fallthru
          _
      $region40: #{tpu_custom_call.1} parent=5 // pred_fallthru
        _
      %p446 = scmp.le.s32.totalorder 2, %s14
      // Predicated region
      $region45: #{tpu_custom_call.1} parent=5 // pred_check
        %p447 = pneg %p446
      $region46: #{tpu_custom_call.1} parent=5 // pred_check_branch
        %449 = sbr.rel (%p447) target = $region48
      $region47: #{tpu_custom_call.1} parent=5 // pred_region
        %s450 = ssub.s32 %s14, 2
        // Predicated region
        $region49: #{tpu_custom_call.1} parent=47 // pred_check
          %p451 = pneg %p169
        $region50: #{tpu_custom_call.1} parent=47 // pred_check_branch
          %453 = sbr.rel (%p451) target = $region52
        $region51: #{tpu_custom_call.1} parent=47 // pred_region
          %s454 = sand.u32 %s154, 1
          %s455 = scalar_lea.sflag [#allocation3], %s454
          %s456 = sand.u32 %s154, 1
          %s457 = smul.addr %s456, 16
          %s458 = scalar_lea.vmem [#allocation2], %s457
          %460 = dma.done %s455, 256
        $region52: #{tpu_custom_call.1} parent=47 // pred_fallthru
          _
      $region48: #{tpu_custom_call.1} parent=5 // pred_fallthru
        _
    $region6: #{tpu_custom_call.1} parent=1 // loop_footer
      %s18 = sadd.s32 1, %s14
    $region7: #{tpu_custom_call.1} parent=1 // loop_footer_branch
      %13 = sbr.rel target = $region3
    $region8: #{tpu_custom_call.1} parent=1 // loop_exit
      _
    %461 = vsyncpa [#allocation3], 1
    %s462 = scalar_lea.sflag [#allocation3], 1
    %463 = vsyncpa %s462, 1

</llo_original>
